<compile_context>
chip_gen: v7x
topology: tpu7x:2x2x1
jax: 0.10.0
libtpu: 0.0.40
codegen_flags: <defaults>
</compile_context>

<pallas_src>
import functools

import jax
import jax.numpy as jnp
from jax.experimental import pallas as pl
from jax.experimental.pallas import tpu as pltpu

NUM_CATEGORIES = 50
LABEL_SMOOTHING = 0.1
FOCAL_GAMMA = 2.0           # integer-valued -> explicit square in-kernel
DEFAULT_POS_WEIGHT = 5.0


def _softplus(x):
    # numerically stable softplus
    return jnp.maximum(x, 0.0) + jnp.log1p(jnp.exp(-jnp.abs(x)))


# ---------------------------------------------------------------------------
# Fused kernel
# ---------------------------------------------------------------------------
def _fused_loss_kernel(*refs, group_bounds, weights):
    cw, aw, lw = weights
    n_groups = len(group_bounds)
    (cat_ref, tgt_ref, attr_tgt_ref,
     lm_pred_ref, lm_coord_ref, lm_vis_ref) = refs[:6]
    attr_pred_refs = refs[6:6 + n_groups]
    out_ref = refs[6 + n_groups]

    # ---------------- category: label smoothing + focal --------------------
    x = cat_ref[...].astype(jnp.float32)                       # [B, C]
    b, c = x.shape
    tgt = tgt_ref[...]                                          # [B, 1] int32
    cls = jax.lax.broadcasted_iota(jnp.int32, (b, c), 1)
    onehot = (cls == tgt).astype(jnp.float32)                   # [B, C]

    m = jnp.max(x, axis=-1, keepdims=True)
    z = x - m
    e = jnp.exp(z)                                              # reused for pt
    sumexp = jnp.sum(e, axis=-1, keepdims=True)                 # [B, 1]
    lse = jnp.log(sumexp)

    # nll = -(z_t - lse), smooth = -mean(logp) = lse - mean(z); logp never built.
    z_t = jnp.sum(onehot * z, axis=-1, keepdims=True)
    nll = lse - z_t                                             # [B, 1]
    smooth = lse - jnp.sum(z, axis=-1, keepdims=True) * (1.0 / c)
    ls_loss = jnp.sum((1.0 - LABEL_SMOOTHING) * nll
                      + LABEL_SMOOTHING * smooth) * (1.0 / b)

    # pt = exp(-nll) = softmax prob of target class, from already-computed exp(z)
    pt = jnp.sum(onehot * e, axis=-1, keepdims=True) * pl.reciprocal(sumexp,
                                                                     approx=True)
    one_m_pt = 1.0 - pt
    focal = jnp.sum(one_m_pt * one_m_pt * nll) * (1.0 / b)      # gamma == 2 -> square
    cat_loss = 0.5 * (ls_loss + focal)

    # ---------------- attributes: per-group balanced BCE-with-logits -------
    at_full = attr_tgt_ref[...].astype(jnp.float32)             # [B, A]
    ab = at_full.shape[0]
    attr_acc = jnp.float32(0.0)
    for g, (lo, hi) in enumerate(group_bounds):                 # static unroll
        w = hi - lo
        ap = attr_pred_refs[g][...].astype(jnp.float32)         # [B, W]
        at = at_full[:, lo:hi]                                  # static lane slice
        num_pos = jnp.sum(at, axis=0, keepdims=True)            # [1, W]
        num_neg = jnp.float32(ab) - num_pos
        pos_w = jnp.where(num_pos > 0.0,
                          num_neg / jnp.maximum(num_pos, 1.0),
                          jnp.float32(DEFAULT_POS_WEIGHT))
        sp = _softplus(ap)                                      # softplus(x) once
        # batch-reduce first, weight after: saves B*W multiplies / [B,W] temps
        s_pos = jnp.sum(at * (sp - ap), axis=0, keepdims=True)  # softplus(-x)=sp-x
        s_neg = jnp.sum(sp - at * sp, axis=0, keepdims=True)    # (1-at)*softplus(x)
        attr_acc = attr_acc + jnp.sum(pos_w * s_pos + s_neg) * (1.0 / (ab * w))
    attr_loss = attr_acc * (1.0 / n_groups)

    # ---------------- landmarks: masked MSE + visibility BCE ---------------
    lp = lm_pred_ref[...].astype(jnp.float32)                   # [B, L, 3]
    lc = lm_coord_ref[...].astype(jnp.float32)                  # [B, L, 2]
    lv = lm_vis_ref[...].astype(jnp.float32)                    # [B, L, 1]
    lb = lp.shape[0]
    L = lp.shape[1]
    # (p*v - t*v) == (p-t)*v exactly since v in {0,1}; everything stays in the
    # (sublane=L, lane=channel) layout -> no relayouts.
    d = (lp[:, :, :2] - lc) * lv                                # [B, L, 2]
    coord_loss = jnp.sum(d * d) * (1.0 / (2.0 * lb * L))
    pv = lp[:, :, 2:3]                                          # [B, L, 1]
    # BCE with logits (no pos_weight): softplus(x) - y*x
    vis_loss = jnp.sum(_softplus(pv) - lv * pv) * (1.0 / (lb * L))
    lm_loss = coord_loss + 0.5 * vis_loss

    # ---------------- combine ----------------------------------------------
    total = cw * cat_loss + aw * attr_loss + lw * lm_loss
    out_ref[0, 0] = total
    out_ref[0, 1] = cat_loss
    out_ref[0, 2] = attr_loss
    out_ref[0, 3] = lm_loss


# ---------------------------------------------------------------------------
# Wrapper
# ---------------------------------------------------------------------------
def _vmem_tile_bytes(shape):
    """f32 lane-padded VMEM footprint of a (>=2D) array."""
    lead = 1
    for d in shape[:-2]:
        lead *= int(d)
    sub = -(-int(shape[-2]) // 8) * 8
    lane = -(-int(shape[-1]) // 128) * 128
    return lead * sub * lane * 4


def fashion_net_loss(predictions, targets,
                     category_weight=1.0, attribute_weight=1.0, landmark_weight=1.0):
    category_pred, attr_preds, landmark_pred = predictions
    categories, attributes, landmark_coords, landmark_vis = targets

    B = category_pred.shape[0]
    C = category_pred.shape[1]

    # static attribute group bounds (no concat of the group predictions)
    bounds = []
    start = 0
    for gp in attr_preds:
        w = gp.shape[1]
        bounds.append((start, start + w))
        start += w
    A = start
    if attributes.shape[1] != A:
        raise ValueError(
            f"attribute target width {attributes.shape[1]} != sum of group widths {A}")

    L = landmark_vis.shape[1]
    lm_vis3 = landmark_vis.reshape(B, L, 1)            # cheap metadata reshape
    tgt = categories.astype(jnp.int32).reshape(B, 1)

    kernel = functools.partial(
        _fused_loss_kernel,
        group_bounds=tuple(bounds),
        weights=(float(category_weight), float(attribute_weight),
                 float(landmark_weight)),
    )

    inputs = (category_pred, tgt, attributes,
              landmark_pred, landmark_coords, lm_vis3, *attr_preds)

    # explicit VMEM budget: padded input tiles + generous headroom for f32 temps
    vmem_in = sum(_vmem_tile_bytes(a.shape) for a in inputs)
    vmem_limit = int(min(max(8 * vmem_in + (2 << 20), 4 << 20), 64 << 20))

    bytes_in = sum(int(a.size) * a.dtype.itemsize for a in inputs)
    cost = pl.CostEstimate(
        flops=int(8 * B * C + 12 * B * A + 12 * B * L),
        transcendentals=int(B * C + 2 * B + 2 * B * A + 2 * B * L),
        bytes_accessed=int(bytes_in + 16),
    )

    out = pl.pallas_call(
        kernel,
        out_shape=jax.ShapeDtypeStruct((1, 4), jnp.float32),
        in_specs=[pl.BlockSpec(memory_space=pltpu.MemorySpace.VMEM)
                  for _ in inputs],
        out_specs=pl.BlockSpec(memory_space=pltpu.MemorySpace.SMEM),
        compiler_params=pltpu.CompilerParams(vmem_limit_bytes=vmem_limit),
        cost_estimate=cost,
    )(*inputs)

    total = out[0, 0]
    parts = {"total": total, "category": out[0, 1],
             "attribute": out[0, 2], "landmark": out[0, 3]}
    return total, parts


# ---------------------------------------------------------------------------
# Pure-JAX reference (mirrors the PyTorch forward) for a correctness check
# ---------------------------------------------------------------------------
def _reference_loss(predictions, targets):
    category_pred, attr_preds, landmark_pred = predictions
    categories, attributes, landmark_coords, landmark_vis = targets

    logp = jax.nn.log_softmax(category_pred, axis=-1)
    nll = -jnp.take_along_axis(logp, categories[:, None], axis=-1)[:, 0]
    smooth = -jnp.mean(logp, axis=-1)
    ls = jnp.mean((1.0 - LABEL_SMOOTHING) * nll + LABEL_SMOOTHING * smooth)
    pt = jnp.exp(-nll)
    focal = jnp.mean((1.0 - pt) ** FOCAL_GAMMA * nll)
    cat = 0.5 * (ls + focal)

    total_a = 0.0
    start = 0
    for gp in attr_preds:
        w = gp.shape[1]
        gt = attributes[:, start:start + w]
        num_pos = jnp.sum(gt, axis=0)
        num_neg = gt.shape[0] - num_pos
        pw = jnp.where(num_pos > 0, num_neg / jnp.maximum(num_pos, 1.0), DEFAULT_POS_WEIGHT)
        elem = pw * gt * jax.nn.softplus(-gp) + (1.0 - gt) * jax.nn.softplus(gp)
        total_a = total_a + jnp.mean(elem)
        start += w
    attr = total_a / len(attr_preds)

    vis = landmark_vis
    coord = jnp.mean((landmark_pred[:, :, :2] * vis[..., None]
                      - landmark_coords * vis[..., None]) ** 2)
    x = landmark_pred[:, :, 2]
    vl = jnp.mean(jax.nn.softplus(x) - vis * x)
    lm = coord + 0.5 * vl
    return cat + attr + lm


if __name__ == "__main__":
    key = jax.random.PRNGKey(0)
    B, C, L = 8, NUM_CATEGORIES, 8
    group_widths = (6, 10)
    ks = jax.random.split(key, 8)

    category_pred = jax.random.normal(ks[0], (B, C), jnp.float32)
    categories = jax.random.randint(ks[1], (B,), 0, C, jnp.int32)
    attr_preds = [jax.random.normal(ks[2], (B, group_widths[0]), jnp.float32),
                  jax.random.normal(ks[3], (B, group_widths[1]), jnp.float32)]
    attributes = (jax.random.uniform(ks[4], (B, sum(group_widths))) < 0.3).astype(jnp.float32)
    landmark_pred = jax.random.normal(ks[5], (B, L, 3), jnp.float32)
    landmark_coords = jax.random.uniform(ks[6], (B, L, 2), jnp.float32)
    landmark_vis = (jax.random.uniform(ks[7], (B, L)) < 0.7).astype(jnp.float32)

    predictions = (category_pred, attr_preds, landmark_pred)
    targets = (categories, attributes, landmark_coords, landmark_vis)

    total, parts = fashion_net_loss(predictions, targets)
    total = jax.block_until_ready(total)

    ref = jax.block_until_ready(_reference_loss(predictions, targets))
    assert abs(float(total) - float(ref)) < 1e-3 * (1.0 + abs(float(ref))), (
        f"mismatch: pallas={float(total)} ref={float(ref)}")

    # mirror the PyTorch return signature: (total, dict of python floats)
    loss_dict = {k: float(v) for k, v in parts.items()}
    print("KERNEL_OK")
</pallas_src>

<mosaic_0001>
module attributes {stable_mosaic.version = 11 : i64} {
  func.func @_fused_loss_kernel(%arg0: memref<8x50xf32, #tpu.memory_space<vmem>>, %arg1: memref<8x1xi32, #tpu.memory_space<vmem>>, %arg2: memref<8x16xf32, #tpu.memory_space<vmem>>, %arg3: memref<8x8x3xf32, #tpu.memory_space<vmem>>, %arg4: memref<8x8x2xf32, #tpu.memory_space<vmem>>, %arg5: memref<8x8x1xf32, #tpu.memory_space<vmem>>, %arg6: memref<8x6xf32, #tpu.memory_space<vmem>>, %arg7: memref<8x10xf32, #tpu.memory_space<vmem>>, %arg8: memref<1x4xf32, #tpu.memory_space<smem>>) attributes {dimension_semantics = [], scalar_prefetch = 0 : i64, scratch_operands = 0 : i64, tpu.core_type = #tpu.core_type<tc>} {
    %c0 = arith.constant 0 : index
    %c0_0 = arith.constant 0 : index
    %0 = vector.load %arg0[%c0, %c0_0] : memref<8x50xf32, #tpu.memory_space<vmem>>, vector<8x50xf32>
    %c0_1 = arith.constant 0 : index
    %c0_2 = arith.constant 0 : index
    %1 = vector.load %arg1[%c0_1, %c0_2] : memref<8x1xi32, #tpu.memory_space<vmem>>, vector<8x1xi32>
    %2 = tpu.iota {dimensions = array<i32: 1>} : vector<8x50xi32>
    %3 = vector.broadcast %1 : vector<8x1xi32> to vector<8x50xi32>
    %4 = arith.cmpi eq, %2, %3 : vector<8x50xi32>
    %5 = arith.extui %4 : vector<8x50xi1> to vector<8x50xi32>
    %6 = arith.sitofp %5 : vector<8x50xi32> to vector<8x50xf32>
    %cst = arith.constant dense<0xFF800000> : vector<8xf32>
    %7 = vector.multi_reduction <maximumf>, %0, %cst [1] : vector<8x50xf32> to vector<8xf32>
    %8 = vector.shape_cast %7 : vector<8xf32> to vector<8x1xf32>
    %9 = vector.broadcast %8 : vector<8x1xf32> to vector<8x50xf32>
    %10 = arith.subf %0, %9 : vector<8x50xf32>
    %11 = math.exp %10 : vector<8x50xf32>
    %cst_3 = arith.constant dense<0.000000e+00> : vector<8xf32>
    %12 = vector.multi_reduction <add>, %11, %cst_3 [1] : vector<8x50xf32> to vector<8xf32>
    %13 = vector.shape_cast %12 : vector<8xf32> to vector<8x1xf32>
    %14 = math.log %13 : vector<8x1xf32>
    %15 = arith.mulf %6, %10 : vector<8x50xf32>
    %cst_4 = arith.constant dense<0.000000e+00> : vector<8xf32>
    %16 = vector.multi_reduction <add>, %15, %cst_4 [1] : vector<8x50xf32> to vector<8xf32>
    %17 = vector.shape_cast %16 : vector<8xf32> to vector<8x1xf32>
    %18 = arith.subf %14, %17 : vector<8x1xf32>
    %cst_5 = arith.constant dense<0.000000e+00> : vector<8xf32>
    %19 = vector.multi_reduction <add>, %10, %cst_5 [1] : vector<8x50xf32> to vector<8xf32>
    %20 = vector.shape_cast %19 : vector<8xf32> to vector<8x1xf32>
    %cst_6 = arith.constant 2.000000e-02 : f32
    %21 = vector.broadcast %cst_6 : f32 to vector<8x1xf32>
    %22 = arith.mulf %20, %21 : vector<8x1xf32>
    %23 = arith.subf %14, %22 : vector<8x1xf32>
    %cst_7 = arith.constant 0.899999976 : f32
    %24 = vector.broadcast %cst_7 : f32 to vector<8x1xf32>
    %25 = arith.mulf %24, %18 : vector<8x1xf32>
    %cst_8 = arith.constant 1.000000e-01 : f32
    %26 = vector.broadcast %cst_8 : f32 to vector<8x1xf32>
    %27 = arith.mulf %26, %23 : vector<8x1xf32>
    %28 = arith.addf %25, %27 : vector<8x1xf32>
    %29 = vector.shape_cast %28 : vector<8x1xf32> to vector<1x8x1xf32>
    %cst_9 = arith.constant dense<0.000000e+00> : vector<1xf32>
    %30 = vector.multi_reduction <add>, %29, %cst_9 [1, 2] : vector<1x8x1xf32> to vector<1xf32>
    %31 = vector.shape_cast %30 : vector<1xf32> to vector<1x1x1xf32>
    %32 = vector.extract %31[0, 0, 0] : f32 from vector<1x1x1xf32>
    %cst_10 = arith.constant 1.250000e-01 : f32
    %33 = arith.mulf %32, %cst_10 : f32
    %34 = arith.mulf %6, %11 : vector<8x50xf32>
    %cst_11 = arith.constant dense<0.000000e+00> : vector<8xf32>
    %35 = vector.multi_reduction <add>, %34, %cst_11 [1] : vector<8x50xf32> to vector<8xf32>
    %36 = vector.shape_cast %35 : vector<8xf32> to vector<8x1xf32>
    %37 = tpu.reciprocal %13 {approx = true} : vector<8x1xf32> -> vector<8x1xf32>
    %38 = arith.mulf %36, %37 : vector<8x1xf32>
    %cst_12 = arith.constant 1.000000e+00 : f32
    %39 = vector.broadcast %cst_12 : f32 to vector<8x1xf32>
    %40 = arith.subf %39, %38 : vector<8x1xf32>
    %41 = arith.mulf %40, %40 : vector<8x1xf32>
    %42 = arith.mulf %41, %18 : vector<8x1xf32>
    %43 = vector.shape_cast %42 : vector<8x1xf32> to vector<1x8x1xf32>
    %cst_13 = arith.constant dense<0.000000e+00> : vector<1xf32>
    %44 = vector.multi_reduction <add>, %43, %cst_13 [1, 2] : vector<1x8x1xf32> to vector<1xf32>
    %45 = vector.shape_cast %44 : vector<1xf32> to vector<1x1x1xf32>
    %46 = vector.extract %45[0, 0, 0] : f32 from vector<1x1x1xf32>
    %cst_14 = arith.constant 1.250000e-01 : f32
    %47 = arith.mulf %46, %cst_14 : f32
    %48 = arith.addf %33, %47 : f32
    %cst_15 = arith.constant 5.000000e-01 : f32
    %49 = arith.mulf %cst_15, %48 : f32
    %c0_16 = arith.constant 0 : index
    %c0_17 = arith.constant 0 : index
    %50 = vector.load %arg2[%c0_16, %c0_17] : memref<8x16xf32, #tpu.memory_space<vmem>>, vector<8x16xf32>
    %c0_18 = arith.constant 0 : index
    %c0_19 = arith.constant 0 : index
    %51 = vector.load %arg6[%c0_18, %c0_19] : memref<8x6xf32, #tpu.memory_space<vmem>>, vector<8x6xf32>
    %52 = vector.extract_strided_slice %50 {offsets = [0, 0], sizes = [8, 6], strides = [1, 1]} : vector<8x16xf32> to vector<8x6xf32>
    %cst_20 = arith.constant dense<0.000000e+00> : vector<6xf32>
    %53 = vector.multi_reduction <add>, %52, %cst_20 [0] : vector<8x6xf32> to vector<6xf32>
    %54 = vector.shape_cast %53 : vector<6xf32> to vector<1x6xf32>
    %cst_21 = arith.constant 8.000000e+00 : f32
    %55 = vector.broadcast %cst_21 : f32 to vector<1x6xf32>
    %56 = arith.subf %55, %54 : vector<1x6xf32>
    %cst_22 = arith.constant 0.000000e+00 : f32
    %57 = vector.broadcast %cst_22 : f32 to vector<1x6xf32>
    %58 = arith.cmpf ogt, %54, %57 : vector<1x6xf32>
    %cst_23 = arith.constant 1.000000e+00 : f32
    %59 = vector.broadcast %cst_23 : f32 to vector<1x6xf32>
    %60 = arith.maximumf %54, %59 : vector<1x6xf32>
    %61 = arith.divf %56, %60 : vector<1x6xf32>
    %cst_24 = arith.constant 5.000000e+00 : f32
    %62 = vector.broadcast %cst_24 : f32 to vector<1x6xf32>
    %63 = arith.select %58, %61, %62 : vector<1x6xi1>, vector<1x6xf32>
    %cst_25 = arith.constant 0.000000e+00 : f32
    %64 = vector.broadcast %cst_25 : f32 to vector<8x6xf32>
    %65 = arith.maximumf %51, %64 : vector<8x6xf32>
    %66 = math.absf %51 : vector<8x6xf32>
    %cst_26 = arith.constant 0.000000e+00 : f32
    %67 = vector.broadcast %cst_26 : f32 to vector<8x6xf32>
    %68 = arith.subf %67, %66 : vector<8x6xf32>
    %69 = math.exp %68 : vector<8x6xf32>
    %70 = math.log1p %69 : vector<8x6xf32>
    %71 = arith.addf %65, %70 : vector<8x6xf32>
    %72 = arith.subf %71, %51 : vector<8x6xf32>
    %73 = arith.mulf %52, %72 : vector<8x6xf32>
    %cst_27 = arith.constant dense<0.000000e+00> : vector<6xf32>
    %74 = vector.multi_reduction <add>, %73, %cst_27 [0] : vector<8x6xf32> to vector<6xf32>
    %75 = vector.shape_cast %74 : vector<6xf32> to vector<1x6xf32>
    %76 = arith.mulf %52, %71 : vector<8x6xf32>
    %77 = arith.subf %71, %76 : vector<8x6xf32>
    %cst_28 = arith.constant dense<0.000000e+00> : vector<6xf32>
    %78 = vector.multi_reduction <add>, %77, %cst_28 [0] : vector<8x6xf32> to vector<6xf32>
    %79 = vector.shape_cast %78 : vector<6xf32> to vector<1x6xf32>
    %80 = arith.mulf %63, %75 : vector<1x6xf32>
    %81 = arith.addf %80, %79 : vector<1x6xf32>
    %82 = vector.shape_cast %81 : vector<1x6xf32> to vector<1x1x6xf32>
    %cst_29 = arith.constant dense<0.000000e+00> : vector<1xf32>
    %83 = vector.multi_reduction <add>, %82, %cst_29 [1, 2] : vector<1x1x6xf32> to vector<1xf32>
    %84 = vector.shape_cast %83 : vector<1xf32> to vector<1x1x1xf32>
    %85 = vector.extract %84[0, 0, 0] : f32 from vector<1x1x1xf32>
    %cst_30 = arith.constant 0.020833334 : f32
    %86 = arith.mulf %85, %cst_30 : f32
    %cst_31 = arith.constant 0.000000e+00 : f32
    %87 = arith.addf %cst_31, %86 : f32
    %c0_32 = arith.constant 0 : index
    %c0_33 = arith.constant 0 : index
    %88 = vector.load %arg7[%c0_32, %c0_33] : memref<8x10xf32, #tpu.memory_space<vmem>>, vector<8x10xf32>
    %89 = vector.extract_strided_slice %50 {offsets = [0, 6], sizes = [8, 10], strides = [1, 1]} : vector<8x16xf32> to vector<8x10xf32>
    %cst_34 = arith.constant dense<0.000000e+00> : vector<10xf32>
    %90 = vector.multi_reduction <add>, %89, %cst_34 [0] : vector<8x10xf32> to vector<10xf32>
    %91 = vector.shape_cast %90 : vector<10xf32> to vector<1x10xf32>
    %cst_35 = arith.constant 8.000000e+00 : f32
    %92 = vector.broadcast %cst_35 : f32 to vector<1x10xf32>
    %93 = arith.subf %92, %91 : vector<1x10xf32>
    %cst_36 = arith.constant 0.000000e+00 : f32
    %94 = vector.broadcast %cst_36 : f32 to vector<1x10xf32>
    %95 = arith.cmpf ogt, %91, %94 : vector<1x10xf32>
    %cst_37 = arith.constant 1.000000e+00 : f32
    %96 = vector.broadcast %cst_37 : f32 to vector<1x10xf32>
    %97 = arith.maximumf %91, %96 : vector<1x10xf32>
    %98 = arith.divf %93, %97 : vector<1x10xf32>
    %cst_38 = arith.constant 5.000000e+00 : f32
    %99 = vector.broadcast %cst_38 : f32 to vector<1x10xf32>
    %100 = arith.select %95, %98, %99 : vector<1x10xi1>, vector<1x10xf32>
    %cst_39 = arith.constant 0.000000e+00 : f32
    %101 = vector.broadcast %cst_39 : f32 to vector<8x10xf32>
    %102 = arith.maximumf %88, %101 : vector<8x10xf32>
    %103 = math.absf %88 : vector<8x10xf32>
    %cst_40 = arith.constant 0.000000e+00 : f32
    %104 = vector.broadcast %cst_40 : f32 to vector<8x10xf32>
    %105 = arith.subf %104, %103 : vector<8x10xf32>
    %106 = math.exp %105 : vector<8x10xf32>
    %107 = math.log1p %106 : vector<8x10xf32>
    %108 = arith.addf %102, %107 : vector<8x10xf32>
    %109 = arith.subf %108, %88 : vector<8x10xf32>
    %110 = arith.mulf %89, %109 : vector<8x10xf32>
    %cst_41 = arith.constant dense<0.000000e+00> : vector<10xf32>
    %111 = vector.multi_reduction <add>, %110, %cst_41 [0] : vector<8x10xf32> to vector<10xf32>
    %112 = vector.shape_cast %111 : vector<10xf32> to vector<1x10xf32>
    %113 = arith.mulf %89, %108 : vector<8x10xf32>
    %114 = arith.subf %108, %113 : vector<8x10xf32>
    %cst_42 = arith.constant dense<0.000000e+00> : vector<10xf32>
    %115 = vector.multi_reduction <add>, %114, %cst_42 [0] : vector<8x10xf32> to vector<10xf32>
    %116 = vector.shape_cast %115 : vector<10xf32> to vector<1x10xf32>
    %117 = arith.mulf %100, %112 : vector<1x10xf32>
    %118 = arith.addf %117, %116 : vector<1x10xf32>
    %119 = vector.shape_cast %118 : vector<1x10xf32> to vector<1x1x10xf32>
    %cst_43 = arith.constant dense<0.000000e+00> : vector<1xf32>
    %120 = vector.multi_reduction <add>, %119, %cst_43 [1, 2] : vector<1x1x10xf32> to vector<1xf32>
    %121 = vector.shape_cast %120 : vector<1xf32> to vector<1x1x1xf32>
    %122 = vector.extract %121[0, 0, 0] : f32 from vector<1x1x1xf32>
    %cst_44 = arith.constant 1.250000e-02 : f32
    %123 = arith.mulf %122, %cst_44 : f32
    %124 = arith.addf %87, %123 : f32
    %cst_45 = arith.constant 5.000000e-01 : f32
    %125 = arith.mulf %124, %cst_45 : f32
    %c0_46 = arith.constant 0 : index
    %c0_47 = arith.constant 0 : index
    %c0_48 = arith.constant 0 : index
    %126 = vector.load %arg3[%c0_46, %c0_47, %c0_48] : memref<8x8x3xf32, #tpu.memory_space<vmem>>, vector<8x8x3xf32>
    %c0_49 = arith.constant 0 : index
    %c0_50 = arith.constant 0 : index
    %c0_51 = arith.constant 0 : index
    %127 = vector.load %arg4[%c0_49, %c0_50, %c0_51] : memref<8x8x2xf32, #tpu.memory_space<vmem>>, vector<8x8x2xf32>
    %c0_52 = arith.constant 0 : index
    %c0_53 = arith.constant 0 : index
    %c0_54 = arith.constant 0 : index
    %128 = vector.load %arg5[%c0_52, %c0_53, %c0_54] : memref<8x8x1xf32, #tpu.memory_space<vmem>>, vector<8x8x1xf32>
    %129 = vector.extract_strided_slice %126 {offsets = [0, 0, 0], sizes = [8, 8, 2], strides = [1, 1, 1]} : vector<8x8x3xf32> to vector<8x8x2xf32>
    %130 = arith.subf %129, %127 : vector<8x8x2xf32>
    %131 = vector.broadcast %128 : vector<8x8x1xf32> to vector<8x8x2xf32>
    %132 = arith.mulf %130, %131 : vector<8x8x2xf32>
    %133 = arith.mulf %132, %132 : vector<8x8x2xf32>
    %134 = vector.shape_cast %133 : vector<8x8x2xf32> to vector<1x8x8x2xf32>
    %cst_55 = arith.constant dense<0.000000e+00> : vector<1xf32>
    %135 = vector.multi_reduction <add>, %134, %cst_55 [1, 2, 3] : vector<1x8x8x2xf32> to vector<1xf32>
    %136 = vector.shape_cast %135 : vector<1xf32> to vector<1x1x1x1xf32>
    %137 = vector.extract %136[0, 0, 0, 0] : f32 from vector<1x1x1x1xf32>
    %cst_56 = arith.constant 7.812500e-03 : f32
    %138 = arith.mulf %137, %cst_56 : f32
    %139 = vector.extract_strided_slice %126 {offsets = [0, 0, 2], sizes = [8, 8, 1], strides = [1, 1, 1]} : vector<8x8x3xf32> to vector<8x8x1xf32>
    %cst_57 = arith.constant 0.000000e+00 : f32
    %140 = vector.broadcast %cst_57 : f32 to vector<8x8x1xf32>
    %141 = arith.maximumf %139, %140 : vector<8x8x1xf32>
    %142 = math.absf %139 : vector<8x8x1xf32>
    %cst_58 = arith.constant 0.000000e+00 : f32
    %143 = vector.broadcast %cst_58 : f32 to vector<8x8x1xf32>
    %144 = arith.subf %143, %142 : vector<8x8x1xf32>
    %145 = math.exp %144 : vector<8x8x1xf32>
    %146 = math.log1p %145 : vector<8x8x1xf32>
    %147 = arith.addf %141, %146 : vector<8x8x1xf32>
    %148 = arith.mulf %128, %139 : vector<8x8x1xf32>
    %149 = arith.subf %147, %148 : vector<8x8x1xf32>
    %150 = vector.shape_cast %149 : vector<8x8x1xf32> to vector<1x8x8x1xf32>
    %cst_59 = arith.constant dense<0.000000e+00> : vector<1xf32>
    %151 = vector.multi_reduction <add>, %150, %cst_59 [1, 2, 3] : vector<1x8x8x1xf32> to vector<1xf32>
    %152 = vector.shape_cast %151 : vector<1xf32> to vector<1x1x1x1xf32>
    %153 = vector.extract %152[0, 0, 0, 0] : f32 from vector<1x1x1x1xf32>
    %cst_60 = arith.constant 1.562500e-02 : f32
    %154 = arith.mulf %153, %cst_60 : f32
    %cst_61 = arith.constant 5.000000e-01 : f32
    %155 = arith.mulf %cst_61, %154 : f32
    %156 = arith.addf %138, %155 : f32
    %cst_62 = arith.constant 1.000000e+00 : f32
    %157 = arith.mulf %cst_62, %49 : f32
    %cst_63 = arith.constant 1.000000e+00 : f32
    %158 = arith.mulf %cst_63, %125 : f32
    %159 = arith.addf %157, %158 : f32
    %cst_64 = arith.constant 1.000000e+00 : f32
    %160 = arith.mulf %cst_64, %156 : f32
    %161 = arith.addf %159, %160 : f32
    %c0_65 = arith.constant 0 : index
    %c0_66 = arith.constant 0 : index
    %162 = memref.load %arg8[%c0_65, %c0_66] : memref<1x4xf32, #tpu.memory_space<smem>>
    memref.store %161, %arg8[%c0_65, %c0_66] : memref<1x4xf32, #tpu.memory_space<smem>>
    %c0_67 = arith.constant 0 : index
    %c1 = arith.constant 1 : index
    %163 = memref.load %arg8[%c0_67, %c1] : memref<1x4xf32, #tpu.memory_space<smem>>
    memref.store %49, %arg8[%c0_67, %c1] : memref<1x4xf32, #tpu.memory_space<smem>>
    %c0_68 = arith.constant 0 : index
    %c2 = arith.constant 2 : index
    %164 = memref.load %arg8[%c0_68, %c2] : memref<1x4xf32, #tpu.memory_space<smem>>
    memref.store %125, %arg8[%c0_68, %c2] : memref<1x4xf32, #tpu.memory_space<smem>>
    %c0_69 = arith.constant 0 : index
    %c3 = arith.constant 3 : index
    %165 = memref.load %arg8[%c0_69, %c3] : memref<1x4xf32, #tpu.memory_space<smem>>
    memref.store %156, %arg8[%c0_69, %c3] : memref<1x4xf32, #tpu.memory_space<smem>>
    return
  }
}

</mosaic_0001>

<llo_original>
// kernel: tpu_custom_call.1
$region0: #{tpu_custom_call.1}
  #allocation0 [shape = 'u32[]', space=smem, size = 0x4, offset = 0x4, fixed_abs, tag = 'smem constant byte address 0x4 - core index']
  #allocation1 [shape = 'u32[144,128]{1,0:T(1,128)}', space=vmem, size = 0x12000, scoped, tag = 'internal scratch']
  %s0 = inlined_call_operand.vmem [shape: f32[8,50], index: 0, kind: input, shape index: {}]
  %s1 = inlined_call_operand.vmem [shape: s32[8,1], index: 1, kind: input, shape index: {}]
  %s2 = inlined_call_operand.vmem [shape: f32[8,16], index: 2, kind: input, shape index: {}]
  %s3 = inlined_call_operand.vmem [shape: f32[8,8,3], index: 3, kind: input, shape index: {}]
  %s4 = inlined_call_operand.vmem [shape: f32[8,8,2], index: 4, kind: input, shape index: {}]
  %s5 = inlined_call_operand.vmem [shape: f32[8,8,1], index: 5, kind: input, shape index: {}]
  %s6 = inlined_call_operand.vmem [shape: f32[8,6], index: 6, kind: input, shape index: {}]
  %s7 = inlined_call_operand.vmem [shape: f32[8,10], index: 7, kind: input, shape index: {}]
  %s8 = inlined_call_operand.hbm [shape: f32[1,4], index: 8, kind: output, shape index: {}]
  %s9 = sld [smem:[#allocation0]]
  $region42: #{tpu_custom_call.1} parent=0
    _
  %s11 = ssub.s32 1, %s9
  %s12 = scalar_select 0, %s11, %s9
  $region1: #{tpu_custom_call.1} parent=0
    #allocation2 [shape = 'u8[512]{0}', space=smem, size = 0x200, scoped, tag = 'output window, operand 0, single buffered']
    #allocation3 [shape = 's32[1]{0}', space=sflag, size = 0x4, scoped, tag = 'scoped memory for tpu_custom_call.1']
    %13 = vsyncpa [#allocation3], 0
    // Predicated region
    $region2: #{tpu_custom_call.1} parent=1 // pred_check
      _
    $region3: #{tpu_custom_call.1} parent=1 // pred_check_branch
      %15 = sbr.rel (0) target = $region5
    $region4: #{tpu_custom_call.1} parent=1 // pred_region
      _
    $region5: #{tpu_custom_call.1} parent=1 // pred_fallthru
      _
    // Predicated region
    $region6: #{tpu_custom_call.1} parent=1 // pred_check
      _
    $region7: #{tpu_custom_call.1} parent=1 // pred_check_branch
      %17 = sbr.rel (0) target = $region9
    $region8: #{tpu_custom_call.1} parent=1 // pred_region
      _
    $region9: #{tpu_custom_call.1} parent=1 // pred_fallthru
      _
    // Predicated region
    $region10: #{tpu_custom_call.1} parent=1 // pred_check
      _
    $region11: #{tpu_custom_call.1} parent=1 // pred_check_branch
      %19 = sbr.rel (0) target = $region13
    $region12: #{tpu_custom_call.1} parent=1 // pred_region
      _
    $region13: #{tpu_custom_call.1} parent=1 // pred_fallthru
      _
    // Predicated region
    $region14: #{tpu_custom_call.1} parent=1 // pred_check
      _
    $region15: #{tpu_custom_call.1} parent=1 // pred_check_branch
      %21 = sbr.rel (0) target = $region17
    $region16: #{tpu_custom_call.1} parent=1 // pred_region
      _
    $region17: #{tpu_custom_call.1} parent=1 // pred_fallthru
      _
    // Predicated region
    $region18: #{tpu_custom_call.1} parent=1 // pred_check
      _
    $region19: #{tpu_custom_call.1} parent=1 // pred_check_branch
      %23 = sbr.rel (0) target = $region21
    $region20: #{tpu_custom_call.1} parent=1 // pred_region
      _
    $region21: #{tpu_custom_call.1} parent=1 // pred_fallthru
      _
    // Predicated region
    $region22: #{tpu_custom_call.1} parent=1 // pred_check
      _
    $region23: #{tpu_custom_call.1} parent=1 // pred_check_branch
      %25 = sbr.rel (0) target = $region25
    $region24: #{tpu_custom_call.1} parent=1 // pred_region
      _
    $region25: #{tpu_custom_call.1} parent=1 // pred_fallthru
      _
    // Predicated region
    $region26: #{tpu_custom_call.1} parent=1 // pred_check
      _
    $region27: #{tpu_custom_call.1} parent=1 // pred_check_branch
      %27 = sbr.rel (0) target = $region29
    $region28: #{tpu_custom_call.1} parent=1 // pred_region
      _
    $region29: #{tpu_custom_call.1} parent=1 // pred_fallthru
      _
    // Predicated region
    $region30: #{tpu_custom_call.1} parent=1 // pred_check
      _
    $region31: #{tpu_custom_call.1} parent=1 // pred_check_branch
      %29 = sbr.rel (0) target = $region33
    $region32: #{tpu_custom_call.1} parent=1 // pred_region
      _
    $region33: #{tpu_custom_call.1} parent=1 // pred_fallthru
      _
    %v30 = vld [vmem:[%s0] sm:$0xff]
    %v31 = vld [vmem:[%s1] sm:$0xff]
    %v32 = vlaneseq
    %v33 = vand.u32 %v32, 127
    %34 = vset.pattern.permute.xlu0 0
    %35 = vperm.xlu0 %34, %v31
    %v36 = vpop.permute.xlu0 %35
    %vm37 = vcmp.eq.s32.totalorder %v33, %v36
    %v38 = vsel %vm37, 1, 0
    %v39 = vcvt.s32.f32 %v38
    %vm40 = vcmask 408576
    %v41 = vsel %vm40, %v30, -inf
    %42 = vmax.xlane.f32.xlu0 %v41
    %v43 = vpop.xlane.xlu0 %42
    %v44 = vsub.f32 %v30, %v43
    %v45 = vmul.f32 %v44, 1.442695
    %v46 = vpow.pop %v45
    %v47 = vsel %vm40, %v46, 0.0
    %48 = vadd.xlane.f32.xlu0 %v47
    %v49 = vpop.xlane.xlu0 %48
    %v50 = vlog2.pop %v49
    %v51 = vmul.f32 %v50, 0.6931472
    %v52 = vmul.f32 %v39, %v44
    %v53 = vsel %vm40, %v52, 0.0
    %54 = vadd.xlane.f32.xlu0 %v53
    %v55 = vpop.xlane.xlu0 %54
    %v56 = vsub.f32 %v51, %v55
    %v57 = vsel %vm40, %v44, 0.0
    %58 = vadd.xlane.f32.xlu0 %v57
    %v59 = vpop.xlane.xlu0 %58
    %v60 = vmul.f32 %v59, 0.02
    %v61 = vsub.f32 %v51, %v60
    %v62 = vmul.f32 %v56, 0.9
    %v63 = vmul.f32 %v61, 0.1
    %v64 = vadd.f32 %v62, %v63
    %vm65 = vcmask 7168
    %v66 = vsel %vm65, %v64, 0.0
    %67 = vadd.xlane.f32.xlu0 %v66
    %v68 = vpop.xlane.xlu0 %67
    %v69 = vrot.slane %v68, 4
    %v70 = vadd.f32 %v68, %v69
    %v71 = vrot.slane %v70, 2
    %v72 = vadd.f32 %v70, %v71
    %v73 = vrot.slane %v72, 1
    %v74 = vadd.f32 %v72, %v73
    %s75 = vtos %v74
    %s76 = smul.f32 %s75, 0.125
    %v77 = vmul.f32 %v39, %v46
    %v78 = vsel %vm40, %v77, 0.0
    %79 = vadd.xlane.f32.xlu0 %v78
    %v80 = vpop.xlane.xlu0 %79
    %v81 = vrcp.pop %v49
    %v82 = vmul.f32 %v80, %v81
    %v83 = vsub.f32 1.0, %v82
    %v84 = vmul.f32 %v83, %v83
    %v85 = vmul.f32 %v84, %v56
    %v86 = vsel %vm65, %v85, 0.0
    %87 = vadd.xlane.f32.xlu0 %v86
    %v88 = vpop.xlane.xlu0 %87
    %v89 = vrot.slane %v88, 4
    %v90 = vadd.f32 %v88, %v89
    %v91 = vrot.slane %v90, 2
    %v92 = vadd.f32 %v90, %v91
    %v93 = vrot.slane %v92, 1
    %v94 = vadd.f32 %v92, %v93
    %s95 = vtos %v94
    %s96 = smul.f32 %s95, 0.125
    %s97 = sadd.f32 %s76, %s96
    %s98 = smul.f32 %s97, 0.5
    %v99 = vld [vmem:[%s2] sm:$0xff]
    %v100 = vld [vmem:[%s6] sm:$0xff]
    %vm101 = vcmask 48128
    %v102 = vsel %vm101, %v99, 0.0
    %v103 = vrot.slane %v102, 4
    %v104 = vadd.f32 %v102, %v103
    %v105 = vrot.slane %v104, 2
    %v106 = vadd.f32 %v104, %v105
    %v107 = vrot.slane %v106, 1
    %v108 = vadd.f32 %v106, %v107
    %v109 = vsub.f32 8.0, %v108
    %vm110 = vcmp.gt.f32.partialorder %v108, 0.0
    %v111 = vmax.f32 %v108, 1.0
    %v112 = vrcp.pop %v111
    %v113 = vmul.f32 %v109, %v112
    %v114 = vsel %vm110, %v113, 5.0
    %v115 = vmax.f32 %v100, 0.0
    %v116 = vand.u32 2147483647, %v100
    %v117 = vsub.f32 0.0, %v116
    %v118 = vmul.f32 %v117, 1.442695
    %v119 = vpow.pop %v118
    %v120 = vadd.f32 %v119, 1.0
    %v121 = vlog2.pop %v120
    %v122 = vmul.f32 %v121, 0.6931472
    %v123 = vmul.f32 -0.5, %v119
    %v124 = vadd.f32 %v123, 1.0
    %v125 = vmul.f32 %v124, %v119
    %v126 = vand.u32 2147483647, %v119
    %vm127 = vcmp.lt.f32.partialorder %v126, 0.0004427343
    %v128 = vsel %vm127, %v125, %v122
    %v129 = vadd.f32 %v115, %v128
    %v130 = vsub.f32 %v129, %v100
    %v131 = vmul.f32 %v99, %v130
    %v132 = vsel %vm101, %v131, 0.0
    %v133 = vrot.slane %v132, 4
    %v134 = vadd.f32 %v132, %v133
    %v135 = vrot.slane %v134, 2
    %v136 = vadd.f32 %v134, %v135
    %v137 = vrot.slane %v136, 1
    %v138 = vadd.f32 %v136, %v137
    %v139 = vmul.f32 %v99, %v129
    %v140 = vsub.f32 %v129, %v139
    %v141 = vsel %vm101, %v140, 0.0
    %v142 = vrot.slane %v141, 4
    %v143 = vadd.f32 %v141, %v142
    %v144 = vrot.slane %v143, 2
    %v145 = vadd.f32 %v143, %v144
    %v146 = vrot.slane %v145, 1
    %v147 = vadd.f32 %v145, %v146
    %v148 = vmul.f32 %v114, %v138
    %v149 = vadd.f32 %v148, %v147
    %vm150 = vcmask 40960
    %v151 = vsel %vm150, %v149, 0.0
    %152 = vadd.xlane.f32.xlu0 %v151
    %v153 = vpop.xlane.xlu0 %152
    %v154 = vrot.slane %v153, 4
    %v155 = vadd.f32 %v153, %v154
    %v156 = vrot.slane %v155, 2
    %v157 = vadd.f32 %v155, %v156
    %v158 = vrot.slane %v157, 1
    %v159 = vadd.f32 %v157, %v158
    %s160 = vtos %v159
    %s161 = smul.f32 %s160, 0.020833334
    %s162 = sadd.f32 %s161, 0.0
    %v163 = vld [vmem:[%s7] sm:$0xff]
    %vm164 = vcmask 130096
    %v165 = vsel %vm164, %v99, 0.0
    %v166 = vrot.slane %v165, 4
    %v167 = vadd.f32 %v165, %v166
    %v168 = vrot.slane %v167, 2
    %v169 = vadd.f32 %v167, %v168
    %v170 = vrot.slane %v169, 1
    %v171 = vadd.f32 %v169, %v170
    %v172 = vsub.f32 8.0, %v171
    %vm173 = vcmp.gt.f32.partialorder %v171, 0.0
    %v174 = vmax.f32 %v171, 1.0
    %v175 = vrcp.pop %v174
    %v176 = vmul.f32 %v172, %v175
    %v177 = vsel %vm173, %v176, 5.0
    %v178 = vmax.f32 %v163, 0.0
    %v179 = vand.u32 2147483647, %v163
    %v180 = vsub.f32 0.0, %v179
    %v181 = vmul.f32 %v180, 1.442695
    %v182 = vpow.pop %v181
    %v183 = vadd.f32 %v182, 1.0
    %v184 = vlog2.pop %v183
    %v185 = vmul.f32 %v184, 0.6931472
    %v186 = vmul.f32 -0.5, %v182
    %v187 = vadd.f32 %v186, 1.0
    %v188 = vmul.f32 %v187, %v182
    %v189 = vand.u32 2147483647, %v182
    %vm190 = vcmp.lt.f32.partialorder %v189, 0.0004427343
    %v191 = vsel %vm190, %v188, %v185
    %v192 = vadd.f32 %v178, %v191
    %v193 = vsub.f32 %v192, %v163
    %195 = vrot.lane.b32.xlu0 %v193, 6
    %v196 = vpop.permute.xlu0 %195
    %v198 = vmul.f32 %v99, %v196
    %v199 = vsel %vm164, %v198, 0.0
    %v200 = vrot.slane %v199, 4
    %v201 = vadd.f32 %v199, %v200
    %v202 = vrot.slane %v201, 2
    %v203 = vadd.f32 %v201, %v202
    %v204 = vrot.slane %v203, 1
    %v205 = vadd.f32 %v203, %v204
    %207 = vrot.lane.b32.xlu0 %v192, 6
    %v208 = vpop.permute.xlu0 %207
    %v210 = vmul.f32 %v99, %v208
    %212 = vrot.lane.b32.xlu0 %v210, 122
    %v213 = vpop.permute.xlu0 %212
    %v215 = vsub.f32 %v192, %v213
    %vm216 = vcmask 80896
    %v217 = vsel %vm216, %v215, 0.0
    %v218 = vrot.slane %v217, 4
    %v219 = vadd.f32 %v217, %v218
    %v220 = vrot.slane %v219, 2
    %v221 = vadd.f32 %v219, %v220
    %v222 = vrot.slane %v221, 1
    %v223 = vadd.f32 %v221, %v222
    %v224 = vmul.f32 %v177, %v205
    %226 = vrot.lane.b32.xlu0 %v223, 6
    %v227 = vpop.permute.xlu0 %226
    %v229 = vadd.f32 %v224, %v227
    %231 = vrot.lane.b32.xlu0 %v229, 122
    %v232 = vpop.permute.xlu0 %231
    %vm234 = vcmask 73728
    %v235 = vsel %vm234, %v232, 0.0
    %236 = vadd.xlane.f32.xlu0 %v235
    %v237 = vpop.xlane.xlu0 %236
    %v238 = vrot.slane %v237, 4
    %v239 = vadd.f32 %v237, %v238
    %v240 = vrot.slane %v239, 2
    %v241 = vadd.f32 %v239, %v240
    %v242 = vrot.slane %v241, 1
    %v243 = vadd.f32 %v241, %v242
    %s244 = vtos %v243
    %s245 = smul.f32 %s244, 0.0125
    %s246 = sadd.f32 %s162, %s245
    %s247 = smul.f32 %s246, 0.5
    %v248 = vld [vmem:[%s3] sm:$0xff]
    %v249 = vld [vmem:[%s3 + $0x8] sm:$0xff]
    %v250 = vld [vmem:[%s3 + $0x10] sm:$0xff]
    %v251 = vld [vmem:[%s3 + $0x18] sm:$0xff]
    %v252 = vld [vmem:[%s3 + $0x20] sm:$0xff]
    %v253 = vld [vmem:[%s3 + $0x28] sm:$0xff]
    %v254 = vld [vmem:[%s3 + $0x30] sm:$0xff]
    %v255 = vld [vmem:[%s3 + $0x38] sm:$0xff]
    %v256 = vld [vmem:[%s4] sm:$0xff]
    %v257 = vld [vmem:[%s4 + $0x8] sm:$0xff]
    %v258 = vld [vmem:[%s4 + $0x10] sm:$0xff]
    %v259 = vld [vmem:[%s4 + $0x18] sm:$0xff]
    %v260 = vld [vmem:[%s4 + $0x20] sm:$0xff]
    %v261 = vld [vmem:[%s4 + $0x28] sm:$0xff]
    %v262 = vld [vmem:[%s4 + $0x30] sm:$0xff]
    %v263 = vld [vmem:[%s4 + $0x38] sm:$0xff]
    %v264 = vld [vmem:[%s5] sm:$0xff]
    %v265 = vld [vmem:[%s5 + $0x8] sm:$0xff]
    %v266 = vld [vmem:[%s5 + $0x10] sm:$0xff]
    %v267 = vld [vmem:[%s5 + $0x18] sm:$0xff]
    %v268 = vld [vmem:[%s5 + $0x20] sm:$0xff]
    %v269 = vld [vmem:[%s5 + $0x28] sm:$0xff]
    %v270 = vld [vmem:[%s5 + $0x30] sm:$0xff]
    %v271 = vld [vmem:[%s5 + $0x38] sm:$0xff]
    %v272 = vsub.f32 %v248, %v256
    %v273 = vsub.f32 %v249, %v257
    %v274 = vsub.f32 %v250, %v258
    %v275 = vsub.f32 %v251, %v259
    %v276 = vsub.f32 %v252, %v260
    %v277 = vsub.f32 %v253, %v261
    %v278 = vsub.f32 %v254, %v262
    %v279 = vsub.f32 %v255, %v263
    %281 = vset.pattern.permute.xlu0 0
    %282 = vperm.xlu0 %281, %v264
    %v283 = vpop.permute.xlu0 %282
    %286 = vset.pattern.permute.xlu0 0
    %287 = vperm.xlu0 %286, %v265
    %v288 = vpop.permute.xlu0 %287
    %291 = vset.pattern.permute.xlu0 0
    %292 = vperm.xlu0 %291, %v266
    %v293 = vpop.permute.xlu0 %292
    %296 = vset.pattern.permute.xlu0 0
    %297 = vperm.xlu0 %296, %v267
    %v298 = vpop.permute.xlu0 %297
    %301 = vset.pattern.permute.xlu0 0
    %302 = vperm.xlu0 %301, %v268
    %v303 = vpop.permute.xlu0 %302
    %306 = vset.pattern.permute.xlu0 0
    %307 = vperm.xlu0 %306, %v269
    %v308 = vpop.permute.xlu0 %307
    %311 = vset.pattern.permute.xlu0 0
    %312 = vperm.xlu0 %311, %v270
    %v313 = vpop.permute.xlu0 %312
    %316 = vset.pattern.permute.xlu0 0
    %317 = vperm.xlu0 %316, %v271
    %v318 = vpop.permute.xlu0 %317
    %v320 = vmul.f32 %v272, %v283
    %v321 = vmul.f32 %v273, %v288
    %v322 = vmul.f32 %v274, %v293
    %v323 = vmul.f32 %v275, %v298
    %v324 = vmul.f32 %v276, %v303
    %v325 = vmul.f32 %v277, %v308
    %v326 = vmul.f32 %v278, %v313
    %v327 = vmul.f32 %v279, %v318
    %v328 = vmul.f32 %v320, %v320
    %v329 = vmul.f32 %v321, %v321
    %v330 = vmul.f32 %v322, %v322
    %v331 = vmul.f32 %v323, %v323
    %v332 = vmul.f32 %v324, %v324
    %v333 = vmul.f32 %v325, %v325
    %v334 = vmul.f32 %v326, %v326
    %v335 = vmul.f32 %v327, %v327
    %vm336 = vcmask 15360
    %v337 = vsel %vm336, %v328, 0.0
    %v338 = vsel %vm336, %v329, 0.0
    %v339 = vadd.f32 %v337, %v338
    %v340 = vsel %vm336, %v330, 0.0
    %v341 = vadd.f32 %v339, %v340
    %v342 = vsel %vm336, %v331, 0.0
    %v343 = vadd.f32 %v341, %v342
    %v344 = vsel %vm336, %v332, 0.0
    %v345 = vadd.f32 %v343, %v344
    %v346 = vsel %vm336, %v333, 0.0
    %v347 = vadd.f32 %v345, %v346
    %v348 = vsel %vm336, %v334, 0.0
    %v349 = vadd.f32 %v347, %v348
    %v350 = vsel %vm336, %v335, 0.0
    %v351 = vadd.f32 %v349, %v350
    %352 = vadd.xlane.f32.xlu0 %v351
    %v353 = vpop.xlane.xlu0 %352
    %v354 = vrot.slane %v353, 4
    %v355 = vadd.f32 %v353, %v354
    %v356 = vrot.slane %v355, 2
    %v357 = vadd.f32 %v355, %v356
    %v358 = vrot.slane %v357, 1
    %v359 = vadd.f32 %v357, %v358
    %s360 = vtos %v359
    %s361 = smul.f32 %s360, 0.0078125
    %v362 = vmax.f32 %v248, 0.0
    %v363 = vmax.f32 %v249, 0.0
    %v364 = vmax.f32 %v250, 0.0
    %v365 = vmax.f32 %v251, 0.0
    %v366 = vmax.f32 %v252, 0.0
    %v367 = vmax.f32 %v253, 0.0
    %v368 = vmax.f32 %v254, 0.0
    %v369 = vmax.f32 %v255, 0.0
    %v370 = vand.u32 2147483647, %v248
    %v371 = vand.u32 2147483647, %v249
    %v372 = vand.u32 2147483647, %v250
    %v373 = vand.u32 2147483647, %v251
    %v374 = vand.u32 2147483647, %v252
    %v375 = vand.u32 2147483647, %v253
    %v376 = vand.u32 2147483647, %v254
    %v377 = vand.u32 2147483647, %v255
    %v378 = vsub.f32 0.0, %v370
    %v379 = vsub.f32 0.0, %v371
    %v380 = vsub.f32 0.0, %v372
    %v381 = vsub.f32 0.0, %v373
    %v382 = vsub.f32 0.0, %v374
    %v383 = vsub.f32 0.0, %v375
    %v384 = vsub.f32 0.0, %v376
    %v385 = vsub.f32 0.0, %v377
    %v386 = vmul.f32 %v378, 1.442695
    %v387 = vpow.pop %v386
    %v388 = vmul.f32 %v379, 1.442695
    %v389 = vpow.pop %v388
    %v390 = vmul.f32 %v380, 1.442695
    %v391 = vpow.pop %v390
    %v392 = vmul.f32 %v381, 1.442695
    %v393 = vpow.pop %v392
    %v394 = vmul.f32 %v382, 1.442695
    %v395 = vpow.pop %v394
    %v396 = vmul.f32 %v383, 1.442695
    %v397 = vpow.pop %v396
    %v398 = vmul.f32 %v384, 1.442695
    %v399 = vpow.pop %v398
    %v400 = vmul.f32 %v385, 1.442695
    %v401 = vpow.pop %v400
    %v402 = vadd.f32 %v387, 1.0
    %v403 = vlog2.pop %v402
    %v404 = vmul.f32 %v403, 0.6931472
    %v405 = vmul.f32 -0.5, %v387
    %v406 = vadd.f32 %v405, 1.0
    %v407 = vmul.f32 %v406, %v387
    %v408 = vand.u32 2147483647, %v387
    %vm409 = vcmp.lt.f32.partialorder %v408, 0.0004427343
    %v410 = vsel %vm409, %v407, %v404
    %v411 = vadd.f32 %v389, 1.0
    %v412 = vlog2.pop %v411
    %v413 = vmul.f32 %v412, 0.6931472
    %v414 = vmul.f32 -0.5, %v389
    %v415 = vadd.f32 %v414, 1.0
    %v416 = vmul.f32 %v415, %v389
    %v417 = vand.u32 2147483647, %v389
    %vm418 = vcmp.lt.f32.partialorder %v417, 0.0004427343
    %v419 = vsel %vm418, %v416, %v413
    %v420 = vadd.f32 %v391, 1.0
    %v421 = vlog2.pop %v420
    %v422 = vmul.f32 %v421, 0.6931472
    %v423 = vmul.f32 -0.5, %v391
    %v424 = vadd.f32 %v423, 1.0
    %v425 = vmul.f32 %v424, %v391
    %v426 = vand.u32 2147483647, %v391
    %vm427 = vcmp.lt.f32.partialorder %v426, 0.0004427343
    %v428 = vsel %vm427, %v425, %v422
    %v429 = vadd.f32 %v393, 1.0
    %v430 = vlog2.pop %v429
    %v431 = vmul.f32 %v430, 0.6931472
    %v432 = vmul.f32 -0.5, %v393
    %v433 = vadd.f32 %v432, 1.0
    %v434 = vmul.f32 %v433, %v393
    %v435 = vand.u32 2147483647, %v393
    %vm436 = vcmp.lt.f32.partialorder %v435, 0.0004427343
    %v437 = vsel %vm436, %v434, %v431
    %v438 = vadd.f32 %v395, 1.0
    %v439 = vlog2.pop %v438
    %v440 = vmul.f32 %v439, 0.6931472
    %v441 = vmul.f32 -0.5, %v395
    %v442 = vadd.f32 %v441, 1.0
    %v443 = vmul.f32 %v442, %v395
    %v444 = vand.u32 2147483647, %v395
    %vm445 = vcmp.lt.f32.partialorder %v444, 0.0004427343
    %v446 = vsel %vm445, %v443, %v440
    %v447 = vadd.f32 %v397, 1.0
    %v448 = vlog2.pop %v447
    %v449 = vmul.f32 %v448, 0.6931472
    %v450 = vmul.f32 -0.5, %v397
    %v451 = vadd.f32 %v450, 1.0
    %v452 = vmul.f32 %v451, %v397
    %v453 = vand.u32 2147483647, %v397
    %vm454 = vcmp.lt.f32.partialorder %v453, 0.0004427343
    %v455 = vsel %vm454, %v452, %v449
    %v456 = vadd.f32 %v399, 1.0
    %v457 = vlog2.pop %v456
    %v458 = vmul.f32 %v457, 0.6931472
    %v459 = vmul.f32 -0.5, %v399
    %v460 = vadd.f32 %v459, 1.0
    %v461 = vmul.f32 %v460, %v399
    %v462 = vand.u32 2147483647, %v399
    %vm463 = vcmp.lt.f32.partialorder %v462, 0.0004427343
    %v464 = vsel %vm463, %v461, %v458
    %v465 = vadd.f32 %v401, 1.0
    %v466 = vlog2.pop %v465
    %v467 = vmul.f32 %v466, 0.6931472
    %v468 = vmul.f32 -0.5, %v401
    %v469 = vadd.f32 %v468, 1.0
    %v470 = vmul.f32 %v469, %v401
    %v471 = vand.u32 2147483647, %v401
    %vm472 = vcmp.lt.f32.partialorder %v471, 0.0004427343
    %v473 = vsel %vm472, %v470, %v467
    %v474 = vadd.f32 %v362, %v410
    %v475 = vadd.f32 %v363, %v419
    %v476 = vadd.f32 %v364, %v428
    %v477 = vadd.f32 %v365, %v437
    %v478 = vadd.f32 %v366, %v446
    %v479 = vadd.f32 %v367, %v455
    %v480 = vadd.f32 %v368, %v464
    %v481 = vadd.f32 %v369, %v473
    %490 = vrot.lane.b32.xlu0 %v248, 126
    %v491 = vpop.permute.xlu0 %490
    %492 = vrot.lane.b32.xlu0 %v249, 126
    %v493 = vpop.permute.xlu0 %492
    %494 = vrot.lane.b32.xlu0 %v250, 126
    %v495 = vpop.permute.xlu0 %494
    %496 = vrot.lane.b32.xlu0 %v251, 126
    %v497 = vpop.permute.xlu0 %496
    %498 = vrot.lane.b32.xlu0 %v252, 126
    %v499 = vpop.permute.xlu0 %498
    %500 = vrot.lane.b32.xlu0 %v253, 126
    %v501 = vpop.permute.xlu0 %500
    %502 = vrot.lane.b32.xlu0 %v254, 126
    %v503 = vpop.permute.xlu0 %502
    %504 = vrot.lane.b32.xlu0 %v255, 126
    %v505 = vpop.permute.xlu0 %504
    %v514 = vmul.f32 %v264, %v491
    %v515 = vmul.f32 %v265, %v493
    %v516 = vmul.f32 %v266, %v495
    %v517 = vmul.f32 %v267, %v497
    %v518 = vmul.f32 %v268, %v499
    %v519 = vmul.f32 %v269, %v501
    %v520 = vmul.f32 %v270, %v503
    %v521 = vmul.f32 %v271, %v505
    %530 = vrot.lane.b32.xlu0 %v514, 2
    %v531 = vpop.permute.xlu0 %530
    %532 = vrot.lane.b32.xlu0 %v515, 2
    %v533 = vpop.permute.xlu0 %532
    %534 = vrot.lane.b32.xlu0 %v516, 2
    %v535 = vpop.permute.xlu0 %534
    %536 = vrot.lane.b32.xlu0 %v517, 2
    %v537 = vpop.permute.xlu0 %536
    %538 = vrot.lane.b32.xlu0 %v518, 2
    %v539 = vpop.permute.xlu0 %538
    %540 = vrot.lane.b32.xlu0 %v519, 2
    %v541 = vpop.permute.xlu0 %540
    %542 = vrot.lane.b32.xlu0 %v520, 2
    %v543 = vpop.permute.xlu0 %542
    %544 = vrot.lane.b32.xlu0 %v521, 2
    %v545 = vpop.permute.xlu0 %544
    %v554 = vsub.f32 %v474, %v531
    %v555 = vsub.f32 %v475, %v533
    %v556 = vsub.f32 %v476, %v535
    %v557 = vsub.f32 %v477, %v537
    %v558 = vsub.f32 %v478, %v539
    %v559 = vsub.f32 %v479, %v541
    %v560 = vsub.f32 %v480, %v543
    %v561 = vsub.f32 %v481, %v545
    %570 = vrot.lane.b32.xlu0 %v554, 126
    %v571 = vpop.permute.xlu0 %570
    %572 = vrot.lane.b32.xlu0 %v555, 126
    %v573 = vpop.permute.xlu0 %572
    %574 = vrot.lane.b32.xlu0 %v556, 126
    %v575 = vpop.permute.xlu0 %574
    %576 = vrot.lane.b32.xlu0 %v557, 126
    %v577 = vpop.permute.xlu0 %576
    %578 = vrot.lane.b32.xlu0 %v558, 126
    %v579 = vpop.permute.xlu0 %578
    %580 = vrot.lane.b32.xlu0 %v559, 126
    %v581 = vpop.permute.xlu0 %580
    %582 = vrot.lane.b32.xlu0 %v560, 126
    %v583 = vpop.permute.xlu0 %582
    %584 = vrot.lane.b32.xlu0 %v561, 126
    %v585 = vpop.permute.xlu0 %584
    %v594 = vsel %vm65, %v571, 0.0
    %v595 = vsel %vm65, %v573, 0.0
    %v596 = vadd.f32 %v594, %v595
    %v597 = vsel %vm65, %v575, 0.0
    %v598 = vadd.f32 %v596, %v597
    %v599 = vsel %vm65, %v577, 0.0
    %v600 = vadd.f32 %v598, %v599
    %v601 = vsel %vm65, %v579, 0.0
    %v602 = vadd.f32 %v600, %v601
    %v603 = vsel %vm65, %v581, 0.0
    %v604 = vadd.f32 %v602, %v603
    %v605 = vsel %vm65, %v583, 0.0
    %v606 = vadd.f32 %v604, %v605
    %v607 = vsel %vm65, %v585, 0.0
    %v608 = vadd.f32 %v606, %v607
    %609 = vadd.xlane.f32.xlu0 %v608
    %v610 = vpop.xlane.xlu0 %609
    %v611 = vrot.slane %v610, 4
    %v612 = vadd.f32 %v610, %v611
    %v613 = vrot.slane %v612, 2
    %v614 = vadd.f32 %v612, %v613
    %v615 = vrot.slane %v614, 1
    %v616 = vadd.f32 %v614, %v615
    %s617 = vtos %v616
    %s618 = smul.f32 %s617, 0.015625
    %s619 = smul.f32 %s618, 0.5
    %s620 = sadd.f32 %s361, %s619
    %s621 = sadd.f32 %s98, %s247
    %s622 = sadd.f32 %s621, %s620
    %s623 = scalar_lea.smem [#allocation2], 0
    %624 = sst [smem:[%s623]] %s622
    %s625 = scalar_lea.smem [#allocation2], 1
    %626 = sst [smem:[%s625]] %s98
    %s627 = scalar_lea.smem [#allocation2], 2
    %628 = sst [smem:[%s627]] %s247
    %s629 = scalar_lea.smem [#allocation2], 3
    %630 = sst [smem:[%s629]] %s620
    // Predicated region
    $region34: #{tpu_custom_call.1} parent=1 // pred_check
      _
    $region35: #{tpu_custom_call.1} parent=1 // pred_check_branch
      %632 = sbr.rel (0) target = $region37
    $region36: #{tpu_custom_call.1} parent=1 // pred_region
      %s634 = ssub.s32 16, 16
      %635 = vsyncadd [#allocation3], %s634
      %638 = dma.smem_to_hbm [#allocation2], 16, %s8, [#allocation3]
    $region37: #{tpu_custom_call.1} parent=1 // pred_fallthru
      _
    // Predicated region
    $region38: #{tpu_custom_call.1} parent=1 // pred_check
      _
    $region39: #{tpu_custom_call.1} parent=1 // pred_check_branch
      %640 = sbr.rel (0) target = $region41
    $region40: #{tpu_custom_call.1} parent=1 // pred_region
      %641 = dma.done [#allocation3], 16
    $region41: #{tpu_custom_call.1} parent=1 // pred_fallthru
      _
    %642 = sfence
    %643 = vsyncpa [#allocation3], 1

</llo_original>
